<compile_context>
chip_gen: v5e
topology: v5e:2x2
jax: 0.10.0
libtpu: 0.0.40
codegen_flags: <defaults>
</compile_context>

<pallas_src>
import math

import jax
import jax.numpy as jnp
from jax.experimental import pallas as pl
from jax.experimental.pallas import tpu as pltpu


def _season_kernel(x_ref, w_ref, b_ref, o_ref):
    # x_ref: (C, Ht)   input slice (channels on sublanes, H on lanes)
    # w_ref: (O, C)    fused projection (poly^T @ conv_weight)
    # b_ref: (O, 1)    fused bias       (poly^T @ conv_bias)
    # o_ref: (O, Ht)   output slice (native NCH layout)
    acc = jnp.dot(w_ref[...], x_ref[...], preferred_element_type=jnp.float32)
    o_ref[...] = (acc + b_ref[...]).astype(o_ref.dtype)


def _choose_h_tile(B, C, O, H, vmem_budget_bytes):
    """Pick a lane-tile for H: 128-multiple, VMEM-budgeted, >= ~8 grid steps."""
    if H < 128:
        return H  # full-dim block, exempt from the (8,128) divisibility rule
    bytes_per_lane = 2 * (C + O) * 4          # double-buffered x + out, f32
    cap = max(128, (vmem_budget_bytes // bytes_per_lane) // 128 * 128)
    h_full = pl.cdiv(H, 128) * 128
    h_tile = min(cap, 2048, h_full)
    # Keep enough grid steps for DMA/compute overlap and megacore balance.
    while h_tile > 128 and B * pl.cdiv(H, h_tile) < 8:
        h_tile = max(128, ((h_tile // 2) + 127) // 128 * 128)
        if h_tile == 128:
            break
    return h_tile


def season_block_forward(x_bch, weight, bias, poly_space, *,
                         h_tile=None,
                         vmem_budget_bytes=24 * 1024 * 1024,
                         force_pallas=False):
    """x_bch: (B, in_dim, H) float32 (PyTorch NCH layout).

    weight: (season_poly, in_dim)   -- Conv1d(k=1) weight, squeezed
    bias:   (season_poly,)
    poly_space: (season_poly, out_dim)  -- fixed Fourier basis
    returns: (B, out_dim, H)
    """
    B, C, H = x_bch.shape
    P, O = poly_space.shape

    # Fuse Conv1d(k=1) + Fourier projection into one (O, C) matrix + (O,) bias.
    w_comb = jnp.dot(poly_space.T, weight)               # (O, C)
    b_proj = jnp.dot(poly_space.T, bias).reshape(O, 1)   # (O, 1)

    # Small-problem bypass: launch + per-step overhead dominates tiny tensors.
    total_bytes = B * (C + O) * H * 4
    if not force_pallas and total_bytes < 256 * 1024:
        return jnp.einsum("oc,bch->boh", w_comb, x_bch) + b_proj[None, :, :]

    if h_tile is None:
        h_tile = _choose_h_tile(B, C, O, H, vmem_budget_bytes)

    grid = (B, pl.cdiv(H, h_tile))

    # Tie the compiler VMEM limit to the actual block footprint (+ headroom),
    # clamped so it always fits v7x's 64 MiB physical VMEM.
    block_bytes = 2 * (C + O) * h_tile * 4       # double-buffered x + out
    weight_bytes = 2 * (O * C + O) * 4           # (tiny) w/b blocks
    vmem_limit = int(min(48 * 1024 * 1024,
                         max(16 * 1024 * 1024,
                             1.5 * (block_bytes + weight_bytes))))

    flops = 2 * B * O * C * H
    bytes_accessed = 4 * (B * C * H + B * O * H + O * C + O)

    out = pl.pallas_call(
        _season_kernel,
        out_shape=jax.ShapeDtypeStruct((B, O, H), x_bch.dtype),
        grid=grid,
        in_specs=[
            pl.BlockSpec((pl.Squeezed(), C, h_tile), lambda b, h: (b, 0, h)),
            pl.BlockSpec((O, C), lambda b, h: (0, 0)),
            pl.BlockSpec((O, 1), lambda b, h: (0, 0)),
        ],
        out_specs=pl.BlockSpec((pl.Squeezed(), O, h_tile),
                               lambda b, h: (b, 0, h)),
        compiler_params=pltpu.CompilerParams(
            dimension_semantics=("parallel", "parallel"),
            vmem_limit_bytes=vmem_limit,
        ),
        cost_estimate=pl.CostEstimate(
            flops=flops, transcendentals=0, bytes_accessed=bytes_accessed),
    )(x_bch, w_comb, b_proj)

    return out


def make_season_block_params(in_dim, out_dim, factor=1, key=None):
    """Deterministic synthetic parameters mirroring SeasonBlock.__init__."""
    season_poly = factor * min(32, int(out_dim // 2))

    if key is None:
        key = jax.random.PRNGKey(0)
    kw, kb = jax.random.split(key)
    # Conv1d(in_dim, season_poly, k=1) default init: U(-1/sqrt(fan_in), ...)
    bound = 1.0 / math.sqrt(in_dim)
    weight = jax.random.uniform(kw, (season_poly, in_dim), jnp.float32,
                                minval=-bound, maxval=bound)
    bias = jax.random.uniform(kb, (season_poly,), jnp.float32,
                              minval=-bound, maxval=bound)

    # Fixed Fourier basis (non-trainable buffer in the PyTorch module).
    fourier_space = jnp.arange(0, out_dim, 1, dtype=jnp.float32) / out_dim
    if season_poly % 2 == 0:
        p1, p2 = season_poly // 2, season_poly // 2
    else:
        p1, p2 = season_poly // 2, season_poly // 2 + 1
    s1 = jnp.stack(
        [jnp.cos(2.0 * jnp.pi * p * fourier_space) for p in range(1, p1 + 1)],
        axis=0)
    s2 = jnp.stack(
        [jnp.sin(2.0 * jnp.pi * p * fourier_space) for p in range(1, p2 + 1)],
        axis=0)
    poly_space = jnp.concatenate([s1, s2], axis=0)   # (season_poly, out_dim)
    return weight, bias, poly_space


def season_block_reference(x_bch, weight, bias, poly_space):
    """Pure-JAX reference matching the PyTorch semantics exactly."""
    conv = jnp.einsum("pc,bch->bph", weight, x_bch) + bias[None, :, None]
    return jnp.einsum("bph,po->boh", conv, poly_space)


if __name__ == "__main__":
    key = jax.random.PRNGKey(0)

    # --- Test 1: small module-spec shapes; force the Pallas path so the
    #     kernel itself is exercised (bypass would otherwise pick einsum).
    B, in_dim, out_dim, H = 2, 4, 16, 8
    kx, kp, key = jax.random.split(key, 3)
    x = jax.random.normal(kx, (B, in_dim, H), dtype=jnp.float32)
    weight, bias, poly_space = make_season_block_params(in_dim, out_dim,
                                                        factor=1, key=kp)
    out = jax.block_until_ready(
        season_block_forward(x, weight, bias, poly_space, force_pallas=True))
    ref = season_block_reference(x, weight, bias, poly_space)
    assert out.shape == (B, out_dim, H), out.shape
    assert jnp.allclose(out, ref, atol=1e-4, rtol=1e-4), "mismatch (small)"

    # --- Test 2: realistic non-128-multiple H (masked last tile) + MXU path.
    B2, in_dim2, out_dim2, H2 = 2, 64, 64, 336
    kx2, kp2 = jax.random.split(key)
    x2 = jax.random.normal(kx2, (B2, in_dim2, H2), dtype=jnp.float32)
    w2, b2, p2 = make_season_block_params(in_dim2, out_dim2, factor=1, key=kp2)
    out2 = jax.block_until_ready(season_block_forward(x2, w2, b2, p2))
    ref2 = season_block_reference(x2, w2, b2, p2)
    assert out2.shape == (B2, out_dim2, H2), out2.shape
    assert jnp.allclose(out2, ref2, atol=1e-4, rtol=1e-4), "mismatch (large)"

    print("KERNEL_OK")
</pallas_src>

<mosaic_0001>
module attributes {stable_mosaic.version = 11 : i64} {
  func.func @_season_kernel(%arg0: i32, %arg1: i32, %arg2: memref<1x4x8xf32, #tpu.memory_space<vmem>>, %arg3: memref<16x4xf32, #tpu.memory_space<vmem>>, %arg4: memref<16x1xf32, #tpu.memory_space<vmem>>, %arg5: memref<1x16x8xf32, #tpu.memory_space<vmem>>) attributes {dimension_semantics = [#tpu.dimension_semantics<parallel>, #tpu.dimension_semantics<parallel>], iteration_bounds = array<i64: 2, 1>, scalar_prefetch = 0 : i64, scratch_operands = 0 : i64, tpu.core_type = #tpu.core_type<tc>, window_params = [{transform_indices = @transform_0, window_bounds = array<i64: 1, 4, 8>}, {pipeline_mode = #tpu.pipeline_mode<synchronous>, transform_indices = @transform_1, window_bounds = array<i64: 16, 4>}, {pipeline_mode = #tpu.pipeline_mode<synchronous>, transform_indices = @transform_2, window_bounds = array<i64: 16, 1>}, {transform_indices = @transform_3, window_bounds = array<i64: 1, 16, 8>}]} {
    %c0 = arith.constant 0 : index
    %c0_0 = arith.constant 0 : index
    %0 = vector.load %arg3[%c0, %c0_0] : memref<16x4xf32, #tpu.memory_space<vmem>>, vector<16x4xf32>
    %c0_1 = arith.constant 0 : index
    %c0_2 = arith.constant 0 : index
    %c0_3 = arith.constant 0 : index
    %1 = vector.load %arg2[%c0_1, %c0_2, %c0_3] : memref<1x4x8xf32, #tpu.memory_space<vmem>>, vector<1x4x8xf32>
    %2 = vector.shape_cast %1 : vector<1x4x8xf32> to vector<4x8xf32>
    %cst = arith.constant dense<0.000000e+00> : vector<16x8xf32>
    %3 = tpu.matmul %0, %2, %cst {dimension_numbers = #tpu.dot_dimension_numbers<[1], [0], [0], [1], [0, 0, 1, 1], [], []>} : vector<16x4xf32>, vector<4x8xf32>, vector<16x8xf32> -> vector<16x8xf32>
    %c0_4 = arith.constant 0 : index
    %c0_5 = arith.constant 0 : index
    %4 = vector.load %arg4[%c0_4, %c0_5] : memref<16x1xf32, #tpu.memory_space<vmem>>, vector<16x1xf32>
    %5 = vector.broadcast %4 : vector<16x1xf32> to vector<16x8xf32>
    %6 = arith.addf %3, %5 : vector<16x8xf32>
    %c0_6 = arith.constant 0 : index
    %c0_7 = arith.constant 0 : index
    %c0_8 = arith.constant 0 : index
    %7 = vector.load %arg5[%c0_6, %c0_7, %c0_8] : memref<1x16x8xf32, #tpu.memory_space<vmem>>, vector<1x16x8xf32>
    %8 = vector.shape_cast %7 : vector<1x16x8xf32> to vector<16x8xf32>
    %9 = vector.shape_cast %6 : vector<16x8xf32> to vector<1x16x8xf32>
    tpu.vector_store %arg5[%c0_6, %c0_7, %c0_8], %9 {strides = array<i32>} : memref<1x16x8xf32, #tpu.memory_space<vmem>>, vector<1x16x8xf32>,
    return
  }
  func.func @transform_0(%arg0: i32, %arg1: i32) -> (i32, i32, i32) {
    %c0_i32 = arith.constant 0 : i32
    %c0_i32_0 = arith.constant 0 : i32
    return %arg0, %c0_i32, %arg1 : i32, i32, i32
  }
  func.func @transform_1(%arg0: i32, %arg1: i32) -> (i32, i32) {
    %c0_i32 = arith.constant 0 : i32
    %c0_i32_0 = arith.constant 0 : i32
    %c0_i32_1 = arith.constant 0 : i32
    return %c0_i32, %c0_i32_0 : i32, i32
  }
  func.func @transform_2(%arg0: i32, %arg1: i32) -> (i32, i32) {
    %c0_i32 = arith.constant 0 : i32
    %c0_i32_0 = arith.constant 0 : i32
    %c0_i32_1 = arith.constant 0 : i32
    return %c0_i32, %c0_i32_0 : i32, i32
  }
  func.func @transform_3(%arg0: i32, %arg1: i32) -> (i32, i32, i32) {
    %c0_i32 = arith.constant 0 : i32
    %c0_i32_0 = arith.constant 0 : i32
    return %arg0, %c0_i32, %arg1 : i32, i32, i32
  }
}

</mosaic_0001>

<llo_original>
// kernel: tpu_custom_call.1
$region0: #{tpu_custom_call.1}
  #allocation0 [shape = 'u32[]', space=smem, size = 0x4, offset = 0x4, fixed_abs, tag = 'smem constant byte address 0x4 - core index']
  #allocation1 [shape = 'u32[72,128]{1,0:T(1,128)}', space=vmem, size = 0x9000, scoped, tag = 'internal scratch']
  %s0 = inlined_call_operand.vmem [shape: f32[2,4,8], index: 0, kind: input, shape index: {}]
  %s1 = inlined_call_operand.vmem [shape: f32[16,4], index: 1, kind: input, shape index: {}]
  %s2 = inlined_call_operand.vmem [shape: f32[16,1], index: 2, kind: input, shape index: {}]
  %s3 = inlined_call_operand.vmem [shape: f32[2,16,8], index: 3, kind: output, shape index: {}]
  %s4 = sld [smem:[#allocation0]]
  $region45: #{tpu_custom_call.1} parent=0
    _
  %s6 = ssub.s32 1, %s4
  %s7 = scalar_select 0, %s6, %s4
  loop: start=0, step=1, limit=4
  $region2: #{tpu_custom_call.1} parent=0 // loop_pre_header
    _
  $region3: #{tpu_custom_call.1} parent=0 // loop_header
    %s9 = sphi 0, %s13
    %p10 = scmp.ge.s32.totalorder %s9, 4
    %s16 = sphi 0, %s28
    %s17 = sphi 0, %s24
    %s18 = sphi 0, %s16
    %s19 = sphi 0, %s17
    %s20 = sphi 0, %s18
    %s21 = sphi 0, %s19
    %s33 = sphi 0, %s35
    %s36 = sphi 0, %s33
    %s37 = sphi 0, %s36
    %s53 = sphi 0, %s37
    %s57 = sphi 0, %s57
    %s59 = sphi 0, %s57
    %s60 = sphi 0, %s59
    %s74 = sphi 0, %s60
    %s78 = sphi 0, %s78
    %s80 = sphi 0, %s78
    %s81 = sphi 0, %s80
    %s95 = sphi 0, %s81
    %s103 = sphi 0, %s105
    %s106 = sphi 0, %s103
    %s107 = sphi 0, %s106
    %s123 = sphi 0, %s107
  $region4: #{tpu_custom_call.1} parent=0 // loop_header_branch
    %12 = sbr.rel (%p10) target = $region8
  $region5: #{tpu_custom_call.1} parent=0 // loop_body
    %s14 = ssub.s32 %s9, 1
    %s15 = ssub.s32 %s9, 2
    %s22 = sadd.s32 1, %s17
    %p23 = scmp.ge.s32.totalorder %s22, 1
    %s24 = scalar_select %p23, 0, %s22
    %s25 = sadd.s32 1, %s16
    %s26 = scalar_select %p23, %s25, %s16
    %p27 = scmp.ge.s32.totalorder %s26, 2
    %s28 = scalar_select %p27, 0, %s26
    %s29 = ssub.s32 %s16, %s28
    %s30 = ssub.s32 %s17, %s24
    %s31 = sor.u32 %s29, %s30
    %p32 = scmp.eq.s32.totalorder %s31, 0
    %s34 = sadd.s32 %s33, 1
    %s35 = scalar_select %p32, %s33, %s34
    %p38 = pneg %p32
    %p39 = scmp.eq.s32.totalorder %s9, 1
    %p40 = por %p38, %p39
    %p41 = scmp.ne.s32.totalorder %s33, %s36
    %p42 = scmp.eq.s32.totalorder %s9, 0
    %p43 = por %p41, %p42
    %p44 = scmp.ne.s32.totalorder %s33, %s36
    %p45 = scmp.eq.s32.totalorder %s14, 1
    %p46 = por %p44, %p45
    %p47 = scmp.ne.s32.totalorder %s36, %s37
    %p48 = scmp.eq.s32.totalorder %s14, 0
    %p49 = por %p47, %p48
    %p50 = scmp.ne.s32.totalorder %s36, %s37
    %p51 = scmp.eq.s32.totalorder %s15, 1
    %p52 = por %p50, %p51
    %p54 = scmp.ne.s32.totalorder %s37, %s53
    %p55 = scmp.eq.s32.totalorder %s15, 0
    %p56 = por %p54, %p55
    %s58 = sadd.s32 %s57, 1
    %p61 = scmp.eq.s32.totalorder %s9, 1
    %p62 = scmp.ne.s32.totalorder %s57, %s59
    %p63 = scmp.eq.s32.totalorder %s9, 0
    %p64 = por %p62, %p63
    %p65 = scmp.ne.s32.totalorder %s57, %s59
    %p66 = scmp.eq.s32.totalorder %s14, 1
    %p67 = por %p65, %p66
    %p68 = scmp.ne.s32.totalorder %s59, %s60
    %p69 = scmp.eq.s32.totalorder %s14, 0
    %p70 = por %p68, %p69
    %p71 = scmp.ne.s32.totalorder %s59, %s60
    %p72 = scmp.eq.s32.totalorder %s15, 1
    %p73 = por %p71, %p72
    %p75 = scmp.ne.s32.totalorder %s60, %s74
    %p76 = scmp.eq.s32.totalorder %s15, 0
    %p77 = por %p75, %p76
    %s79 = sadd.s32 %s78, 1
    %p82 = scmp.eq.s32.totalorder %s9, 1
    %p83 = scmp.ne.s32.totalorder %s78, %s80
    %p84 = scmp.eq.s32.totalorder %s9, 0
    %p85 = por %p83, %p84
    %p86 = scmp.ne.s32.totalorder %s78, %s80
    %p87 = scmp.eq.s32.totalorder %s14, 1
    %p88 = por %p86, %p87
    %p89 = scmp.ne.s32.totalorder %s80, %s81
    %p90 = scmp.eq.s32.totalorder %s14, 0
    %p91 = por %p89, %p90
    %p92 = scmp.ne.s32.totalorder %s80, %s81
    %p93 = scmp.eq.s32.totalorder %s15, 1
    %p94 = por %p92, %p93
    %p96 = scmp.ne.s32.totalorder %s81, %s95
    %p97 = scmp.eq.s32.totalorder %s15, 0
    %p98 = por %p96, %p97
    %s99 = ssub.s32 %s16, %s28
    %s100 = ssub.s32 %s17, %s24
    %s101 = sor.u32 %s99, %s100
    %p102 = scmp.eq.s32.totalorder %s101, 0
    %s104 = sadd.s32 %s103, 1
    %s105 = scalar_select %p102, %s103, %s104
    %p108 = pneg %p102
    %p109 = scmp.eq.s32.totalorder %s9, 1
    %p110 = por %p108, %p109
    %p111 = scmp.ne.s32.totalorder %s103, %s106
    %p112 = scmp.eq.s32.totalorder %s9, 0
    %p113 = por %p111, %p112
    %p114 = scmp.ne.s32.totalorder %s103, %s106
    %p115 = scmp.eq.s32.totalorder %s14, 1
    %p116 = por %p114, %p115
    %p117 = scmp.ne.s32.totalorder %s106, %s107
    %p118 = scmp.eq.s32.totalorder %s14, 0
    %p119 = por %p117, %p118
    %p120 = scmp.ne.s32.totalorder %s106, %s107
    %p121 = scmp.eq.s32.totalorder %s15, 1
    %p122 = por %p120, %p121
    %p124 = scmp.ne.s32.totalorder %s107, %s123
    %p125 = scmp.eq.s32.totalorder %s15, 0
    %p126 = por %p124, %p125
    %p127 = scmp.le.s32.totalorder 1, %s9
    %p128 = scmp.lt.s32.totalorder %s9, 3
    %p129 = pnand %p127, %p128
    %p130 = pneg %p129
    // Predicated region
    $region9: #{tpu_custom_call.1} parent=5 // pred_check
      _
    $region10: #{tpu_custom_call.1} parent=5 // pred_check_branch
      %132 = sbr.rel (%p129) target = $region12
    $region11: #{tpu_custom_call.1} parent=5 // pred_region
      %s133 = ssub.s32 %s9, 1
      // Predicated region
      $region13: #{tpu_custom_call.1} parent=11 // pred_check
        %p134 = pneg %p70
      $region14: #{tpu_custom_call.1} parent=11 // pred_check_branch
        %136 = sbr.rel (%p134) target = $region16
      $region15: #{tpu_custom_call.1} parent=11 // pred_region
        _
      $region16: #{tpu_custom_call.1} parent=11 // pred_fallthru
        _
      // Predicated region
      $region17: #{tpu_custom_call.1} parent=11 // pred_check
        %p137 = pneg %p91
      $region18: #{tpu_custom_call.1} parent=11 // pred_check_branch
        %139 = sbr.rel (%p137) target = $region20
      $region19: #{tpu_custom_call.1} parent=11 // pred_region
        _
      $region20: #{tpu_custom_call.1} parent=11 // pred_fallthru
        _
    $region12: #{tpu_custom_call.1} parent=5 // pred_fallthru
      _
    %p140 = scmp.lt.s32.totalorder %s9, 2
    // Predicated region
    $region21: #{tpu_custom_call.1} parent=5 // pred_check
      %p141 = pneg %p140
    $region22: #{tpu_custom_call.1} parent=5 // pred_check_branch
      %143 = sbr.rel (%p141) target = $region24
    $region23: #{tpu_custom_call.1} parent=5 // pred_region
      // Predicated region
      $region25: #{tpu_custom_call.1} parent=23 // pred_check
        %p144 = pneg %p43
      $region26: #{tpu_custom_call.1} parent=23 // pred_check_branch
        %146 = sbr.rel (%p144) target = $region28
      $region27: #{tpu_custom_call.1} parent=23 // pred_region
        %p147 = scmp.lt.s32.totalorder %s16, 1
        %s148 = scalar_select %p147, %s16, 1
        %p149 = scmp.lt.s32.totalorder %s17, 0
        %s150 = scalar_select %p149, %s17, 0
        %s151 = sadd.s32 %s150, %s148
        %s152 = smul.addr %s151, 4
        %s153 = scalar_lea.vmem %s0, %s152
      $region28: #{tpu_custom_call.1} parent=23 // pred_fallthru
        _
    $region24: #{tpu_custom_call.1} parent=5 // pred_fallthru
      _
    %p154 = scmp.le.s32.totalorder 1, %s9
    %p155 = scmp.lt.s32.totalorder %s9, 3
    %p156 = pnand %p154, %p155
    %p157 = pneg %p156
    // Predicated region
    $region29: #{tpu_custom_call.1} parent=5 // pred_check
      _
    $region30: #{tpu_custom_call.1} parent=5 // pred_check_branch
      %159 = sbr.rel (%p156) target = $region32
    $region31: #{tpu_custom_call.1} parent=5 // pred_region
      %s160 = ssub.s32 %s9, 1
      %p161 = scmp.lt.s32.totalorder %s18, 1
      %s162 = scalar_select %p161, %s18, 1
      %p163 = scmp.lt.s32.totalorder %s19, 0
      %s164 = scalar_select %p163, %s19, 0
      %s165 = sadd.s32 %s164, %s162
      %s166 = smul.addr %s165, 4
      %s167 = scalar_lea.vmem %s0, %s166
      %p168 = pneg %p49
      %p169 = pneg %p46
      %p170 = pneg %p70
      %p171 = pneg %p67
      %p172 = pneg %p91
      %p173 = pneg %p88
      %p174 = pneg %p119
      %p175 = pneg %p116
      %p176 = scmp.lt.s32.totalorder %s18, 1
      %s177 = scalar_select %p176, %s18, 1
      %p178 = scmp.lt.s32.totalorder %s19, 0
      %s179 = scalar_select %p178, %s19, 0
      %s180 = smul.addr %s177, 2
      %s181 = sadd.s32 %s179, %s180
      %s182 = smul.addr %s181, 8
      %s183 = scalar_lea.vmem %s3, %s182
      %p184 = scmp.lt.s32.totalorder %s18, 1
      %s185 = scalar_select %p184, %s18, 1
      %p186 = scmp.lt.s32.totalorder %s19, 0
      %s187 = scalar_select %p186, %s19, 0
      %s188 = sadd.s32 %s187, %s185
      %s189 = smul.addr %s188, 4
      %s190 = scalar_lea.vmem %s0, %s189
      %p191 = scmp.lt.s32.totalorder %s18, 1
      %s192 = scalar_select %p191, %s18, 1
      %p193 = scmp.lt.s32.totalorder %s19, 0
      %s194 = scalar_select %p193, %s19, 0
      %s195 = smul.addr %s192, 2
      %s196 = sadd.s32 %s194, %s195
      %s197 = smul.addr %s196, 8
      %s198 = scalar_lea.vmem %s3, %s197
      %v199 = vld [vmem:[%s1] sm:$0xff]
      %v200 = vld [vmem:[%s1 + $0x8] sm:$0xff]
      %v201 = vld [vmem:[%s190] sm:$0xf]
      %v202 = vld [vmem:[%s2] sm:$0xff]
      %v203 = vld [vmem:[%s2 + $0x8] sm:$0xff]
      %205 = vset.pattern.permute.xlu0 0
      %206 = vperm.xlu0 %205, %v202
      %v207 = vpop.permute.xlu0 %206
      %210 = vset.pattern.permute.xlu0 0
      %211 = vperm.xlu0 %210, %v203
      %v212 = vpop.permute.xlu0 %211
      %vm214 = vcmask 31744
      %v216 = vsel %vm214, %v199, 0
      %v219 = vsel %vm214, %v200, 0
      %vm221 = vcmask 1043456
      %v223 = vsel %vm221, %v201, 0
      %225 = vmatpush.msra.mxu0 0.0
      %226 = vmatpush.msra.mxu0 0.0
      %227 = vmatpush.msra.mxu0 0.0
      %228 = vmatpush.msra.mxu0 0.0
      %229 = vmatpush.msra.mxu0 0.0
      %230 = vmatpush.msra.mxu0 0.0
      %231 = vmatpush.msra.mxu0 0.0
      %232 = vmatpush.msra.mxu0 0.0
      %233 = vmatpush.msra.mxu0 0.0
      %234 = vmatpush.msra.mxu0 0.0
      %235 = vmatpush.msra.mxu0 0.0
      %236 = vmatpush.msra.mxu0 0.0
      %237 = vmatpush.msra.mxu0 0.0
      %238 = vmatpush.msra.mxu0 0.0
      %239 = vmatpush.msra.mxu0 0.0
      %240 = vmatpush.msra.mxu0 %v223
      %241 = vmatmul.f32.gmra.mxu0 %v216
      %v242 = vpop.f32.mrf.mxu0
      %v243 = vadd.f32 %v207, %v242
      %244 = vmatmul.f32.gmra.mxu0 %v219
      %v245 = vpop.f32.mrf.mxu0
      %v246 = vadd.f32 %v212, %v245
      %247 = vdwg.mxu0
      %vm248 = vcmask 64512
      %249 = vst.msk [vmem:[%s198] sm:$0xff] %vm248, %v243
      %250 = vst.msk [vmem:[%s198 + $0x8] sm:$0xff] %vm248, %v246
      %p251 = scmp.lt.s32.totalorder %s18, 1
      %s252 = scalar_select %p251, %s18, 1
      %p253 = scmp.lt.s32.totalorder %s19, 0
      %s254 = scalar_select %p253, %s19, 0
      %s255 = smul.addr %s252, 2
      %s256 = sadd.s32 %s254, %s255
      %s257 = smul.addr %s256, 8
      %s258 = scalar_lea.vmem %s3, %s257
      // Predicated region
      $region33: #{tpu_custom_call.1} parent=31 // pred_check
        %p259 = pneg %p116
      $region34: #{tpu_custom_call.1} parent=31 // pred_check_branch
        %261 = sbr.rel (%p259) target = $region36
      $region35: #{tpu_custom_call.1} parent=31 // pred_region
        _
      $region36: #{tpu_custom_call.1} parent=31 // pred_fallthru
        _
    $region32: #{tpu_custom_call.1} parent=5 // pred_fallthru
      _
    %p262 = scmp.le.s32.totalorder 2, %s9
    // Predicated region
    $region37: #{tpu_custom_call.1} parent=5 // pred_check
      %p263 = pneg %p262
    $region38: #{tpu_custom_call.1} parent=5 // pred_check_branch
      %265 = sbr.rel (%p263) target = $region40
    $region39: #{tpu_custom_call.1} parent=5 // pred_region
      %s266 = ssub.s32 %s9, 2
      // Predicated region
      $region41: #{tpu_custom_call.1} parent=39 // pred_check
        %p267 = pneg %p122
      $region42: #{tpu_custom_call.1} parent=39 // pred_check_branch
        %269 = sbr.rel (%p267) target = $region44
      $region43: #{tpu_custom_call.1} parent=39 // pred_region
        %p270 = scmp.lt.s32.totalorder %s20, 1
        %s271 = scalar_select %p270, %s20, 1
        %p272 = scmp.lt.s32.totalorder %s21, 0
        %s273 = scalar_select %p272, %s21, 0
        %s274 = smul.addr %s271, 2
        %s275 = sadd.s32 %s273, %s274
        %s276 = smul.addr %s275, 8
        %s277 = scalar_lea.vmem %s3, %s276
      $region44: #{tpu_custom_call.1} parent=39 // pred_fallthru
        _
    $region40: #{tpu_custom_call.1} parent=5 // pred_fallthru
      _
  $region6: #{tpu_custom_call.1} parent=0 // loop_footer
    %s13 = sadd.s32 1, %s9
  $region7: #{tpu_custom_call.1} parent=0 // loop_footer_branch
    %8 = sbr.rel target = $region3
  $region8: #{tpu_custom_call.1} parent=0 // loop_exit
    _

</llo_original>
